<compile_context>
chip_gen: v5e
topology: v5e:2x2
jax: 0.10.0
libtpu: 0.0.40
codegen_flags: <defaults>
</compile_context>

<pallas_src>
import functools
import math

import jax
import jax.numpy as jnp
from jax.experimental import pallas as pl
from jax.experimental.pallas import tpu as pltpu


def _mha_fused_kernel(x_ref, w_ref, o_ref, *, head, dk):
    # x_ref: (S, D)           token embeddings, whole array resident in VMEM
    # w_ref: (D, H*3*dk)      packed weights; per head a [Wq*inv_sqrt_dv|Wk|Wv]
    #                         column block of width 3*dk
    # o_ref: (S, H*dk)        concatenated per-head attention outputs
    x = x_ref[...]            # f32 — feeds the MXU directly
    w = w_ref[...]
    S = x.shape[0]
    c = 3 * dk

    # One MXU pass for every projection of every head: (S, D) @ (D, H*3*dk).
    qkv = jnp.dot(x, w, preferred_element_type=jnp.float32)          # (S, H*3*dk)

    # Head-batched relayout: H cheap lane slices stacked along a new leading
    # batch axis, so all following matmuls / reductions are batched over heads.
    qkv_h = jnp.stack([qkv[:, h * c:(h + 1) * c] for h in range(head)],
                      axis=0)                                         # (H, S, 3*dk)
    q = qkv_h[..., :dk]          # 1/sqrt(dv) already folded in at pack time
    k = qkv_h[..., dk:2 * dk]
    v = qkv_h[..., 2 * dk:]

    # Scores for ALL heads in one batched contraction; K is consumed
    # untransposed (dk contracted on both operands -> no XLU vxpose).
    s = jnp.einsum('hqd,hkd->hqk', q, k,
                   preferred_element_type=jnp.float32)                # (H, S, S)

    # One whole-slab softmax over the key axis (== torch.softmax(dim=1) per
    # head), numerically stabilized; denominator via EUP approx reciprocal.
    s = s - jnp.max(s, axis=-1, keepdims=True)
    p = jnp.exp(s)
    p = p * pl.reciprocal(jnp.sum(p, axis=-1, keepdims=True), approx=True)

    # Batched P @ V for all heads.
    o = jnp.einsum('hqk,hkd->hqd', p, v,
                   preferred_element_type=jnp.float32)                # (H, S, dk)

    # torch.cat(output, dim=1): one lane-dense (S, H*dk) slab, single store.
    o_ref[...] = jnp.concatenate([o[h] for h in range(head)],
                                 axis=1).astype(o_ref.dtype)

    # TODO(synk): the per-head shape `print` from the torch forward is debug
    # logging with no clean in-kernel equivalent and is intentionally omitted.


def pack_mha_weights(w_q, w_k, w_v):
    """One-time layout plumbing (call ONCE, outside the per-step path).

    [H, D, dk] x3  ->  [D, H*3*dk] where column block h is
    [w_q[h]/sqrt(dv) | w_k[h] | w_v[h]]; the 1/sqrt(dv) scale is folded into
    the Wq block so the kernel never multiplies Q.
    """
    H, D, dk = w_q.shape
    inv_sqrt_dv = 1.0 / math.sqrt(dk)          # dv == dk == d_model // head
    w = jnp.concatenate([w_q * inv_sqrt_dv, w_k, w_v], axis=-1)   # (H, D, 3*dk)
    return jnp.transpose(w, (1, 0, 2)).reshape(D, H * 3 * dk)


@functools.partial(jax.jit, static_argnames=("head",))
def multi_head_attention(tokens, w_packed, *, head):
    """tokens: [S, D]; w_packed: [D, H*3*dk] from pack_mha_weights.

    Returns [S, H*dk] (== [S, D]), matching torch.cat(per-head outputs, dim=1).
    """
    S, D = tokens.shape
    dk = w_packed.shape[1] // (3 * head)

    kernel = functools.partial(_mha_fused_kernel, head=head, dk=dk)

    flops = (2 * S * D * 3 * head * dk            # QKV projection
             + 2 * head * S * S * dk              # scores
             + 2 * head * S * S * dk)             # P @ V
    transcendentals = head * S * S + head * S     # exp + reciprocal
    bytes_accessed = 4 * (S * D + D * 3 * head * dk + S * head * dk)

    # Single invocation, no grid: tokens (1 KiB) + packed weights (12 KiB) +
    # output (1 KiB) trivially fit VMEM on v5e/v6e/v7x, so per-step grid
    # overhead and per-head DMAs are eliminated entirely.
    return pl.pallas_call(
        kernel,
        out_shape=jax.ShapeDtypeStruct((S, head * dk), jnp.float32),
        in_specs=[
            pl.BlockSpec(memory_space=pltpu.MemorySpace.VMEM),  # tokens
            pl.BlockSpec(memory_space=pltpu.MemorySpace.VMEM),  # packed W_qkv
        ],
        out_specs=pl.BlockSpec(memory_space=pltpu.MemorySpace.VMEM),
        cost_estimate=pl.CostEstimate(flops=flops,
                                      transcendentals=transcendentals,
                                      bytes_accessed=bytes_accessed),
    )(tokens, w_packed)


def _reference(tokens, w_q, w_k, w_v):
    """Pure-JAX reference mirroring the PyTorch forward."""
    H, _, dk = w_q.shape
    outs = []
    for h in range(H):
        q = tokens @ w_q[h]
        k = tokens @ w_k[h]
        v = tokens @ w_v[h]
        s = (q @ k.T) / math.sqrt(dk)
        p = jax.nn.softmax(s, axis=1)
        outs.append(p @ v)
    return jnp.concatenate(outs, axis=1)


if __name__ == "__main__":
    head = 8
    d_model = 32
    seq = 8
    dk = d_model // head

    key = jax.random.PRNGKey(0)
    k_tok, k_q, k_k, k_v = jax.random.split(key, 4)

    tokens = jax.random.normal(k_tok, (seq, d_model), dtype=jnp.float32)
    w_q = jax.random.normal(k_q, (head, d_model, dk), dtype=jnp.float32)
    w_k = jax.random.normal(k_k, (head, d_model, dk), dtype=jnp.float32)
    w_v = jax.random.normal(k_v, (head, d_model, dk), dtype=jnp.float32)

    # One-time weight packing, hoisted out of the per-call path (in a real
    # model the weights would simply be stored in this layout).
    w_packed = jax.block_until_ready(pack_mha_weights(w_q, w_k, w_v))

    out = multi_head_attention(tokens, w_packed, head=head)
    out = jax.block_until_ready(out)

    ref = _reference(tokens, w_q, w_k, w_v)
    assert out.shape == (seq, d_model), out.shape
    # Tolerance accounts for the EUP approximate reciprocal (~1e-4 relative)
    # used for the softmax denominator; everything else accumulates in f32.
    # Switch to pl.reciprocal(..., approx=False) if bit-closer parity with
    # torch.softmax is ever required.
    assert jnp.allclose(out, ref, atol=5e-3, rtol=5e-3), float(
        jnp.max(jnp.abs(out - ref)))

    print("KERNEL_OK")
</pallas_src>

<mosaic_0001>
module attributes {stable_mosaic.version = 11 : i64} {
  func.func @_mha_fused_kernel(%arg0: memref<8x32xf32, #tpu.memory_space<vmem>>, %arg1: memref<32x96xf32, #tpu.memory_space<vmem>>, %arg2: memref<8x32xf32, #tpu.memory_space<vmem>>) attributes {dimension_semantics = [], scalar_prefetch = 0 : i64, scratch_operands = 0 : i64, tpu.core_type = #tpu.core_type<tc>} {
    %c0 = arith.constant 0 : index
    %c0_0 = arith.constant 0 : index
    %0 = vector.load %arg0[%c0, %c0_0] : memref<8x32xf32, #tpu.memory_space<vmem>>, vector<8x32xf32>
    %c0_1 = arith.constant 0 : index
    %c0_2 = arith.constant 0 : index
    %1 = vector.load %arg1[%c0_1, %c0_2] : memref<32x96xf32, #tpu.memory_space<vmem>>, vector<32x96xf32>
    %cst = arith.constant dense<0.000000e+00> : vector<8x96xf32>
    %2 = tpu.matmul %0, %1, %cst {dimension_numbers = #tpu.dot_dimension_numbers<[1], [0], [0], [1], [0, 0, 1, 1], [], []>} : vector<8x32xf32>, vector<32x96xf32>, vector<8x96xf32> -> vector<8x96xf32>
    %3 = vector.extract_strided_slice %2 {offsets = [0, 0], sizes = [8, 12], strides = [1, 1]} : vector<8x96xf32> to vector<8x12xf32>
    %4 = vector.extract_strided_slice %2 {offsets = [0, 12], sizes = [8, 12], strides = [1, 1]} : vector<8x96xf32> to vector<8x12xf32>
    %5 = vector.extract_strided_slice %2 {offsets = [0, 24], sizes = [8, 12], strides = [1, 1]} : vector<8x96xf32> to vector<8x12xf32>
    %6 = vector.extract_strided_slice %2 {offsets = [0, 36], sizes = [8, 12], strides = [1, 1]} : vector<8x96xf32> to vector<8x12xf32>
    %7 = vector.extract_strided_slice %2 {offsets = [0, 48], sizes = [8, 12], strides = [1, 1]} : vector<8x96xf32> to vector<8x12xf32>
    %8 = vector.extract_strided_slice %2 {offsets = [0, 60], sizes = [8, 12], strides = [1, 1]} : vector<8x96xf32> to vector<8x12xf32>
    %9 = vector.extract_strided_slice %2 {offsets = [0, 72], sizes = [8, 12], strides = [1, 1]} : vector<8x96xf32> to vector<8x12xf32>
    %10 = vector.extract_strided_slice %2 {offsets = [0, 84], sizes = [8, 12], strides = [1, 1]} : vector<8x96xf32> to vector<8x12xf32>
    %11 = vector.shape_cast %3 : vector<8x12xf32> to vector<1x8x12xf32>
    %12 = vector.shape_cast %4 : vector<8x12xf32> to vector<1x8x12xf32>
    %13 = vector.shape_cast %5 : vector<8x12xf32> to vector<1x8x12xf32>
    %14 = vector.shape_cast %6 : vector<8x12xf32> to vector<1x8x12xf32>
    %15 = vector.shape_cast %7 : vector<8x12xf32> to vector<1x8x12xf32>
    %16 = vector.shape_cast %8 : vector<8x12xf32> to vector<1x8x12xf32>
    %17 = vector.shape_cast %9 : vector<8x12xf32> to vector<1x8x12xf32>
    %18 = vector.shape_cast %10 : vector<8x12xf32> to vector<1x8x12xf32>
    %19 = tpu.concatenate %11, %12, %13, %14, %15, %16, %17, %18 in 0 : vector<1x8x12xf32>, vector<1x8x12xf32>, vector<1x8x12xf32>, vector<1x8x12xf32>, vector<1x8x12xf32>, vector<1x8x12xf32>, vector<1x8x12xf32>, vector<1x8x12xf32> -> vector<8x8x12xf32>
    %20 = vector.extract_strided_slice %19 {offsets = [0, 0, 0], sizes = [8, 8, 4], strides = [1, 1, 1]} : vector<8x8x12xf32> to vector<8x8x4xf32>
    %21 = vector.extract_strided_slice %19 {offsets = [0, 0, 4], sizes = [8, 8, 4], strides = [1, 1, 1]} : vector<8x8x12xf32> to vector<8x8x4xf32>
    %22 = vector.extract_strided_slice %19 {offsets = [0, 0, 8], sizes = [8, 8, 4], strides = [1, 1, 1]} : vector<8x8x12xf32> to vector<8x8x4xf32>
    "tpu.trace_start"() <{level = 10 : i32, message = "hqd,hkd->hqk"}> : () -> ()
    %cst_3 = arith.constant dense<0.000000e+00> : vector<8x8x8xf32>
    %23 = tpu.matmul %20, %21, %cst_3 {dimension_numbers = #tpu.dot_dimension_numbers<[2], [2], [1], [1], [0, 0, 0, 1, 1, 1], [0], [0]>} : vector<8x8x4xf32>, vector<8x8x4xf32>, vector<8x8x8xf32> -> vector<8x8x8xf32>
    "tpu.trace_stop"() : () -> ()
    %cst_4 = arith.constant dense<0xFF800000> : vector<8x8xf32>
    %24 = vector.multi_reduction <maximumf>, %23, %cst_4 [2] : vector<8x8x8xf32> to vector<8x8xf32>
    %25 = vector.shape_cast %24 : vector<8x8xf32> to vector<8x8x1xf32>
    %26 = vector.broadcast %25 : vector<8x8x1xf32> to vector<8x8x8xf32>
    %27 = arith.subf %23, %26 : vector<8x8x8xf32>
    %28 = math.exp %27 : vector<8x8x8xf32>
    %cst_5 = arith.constant dense<0.000000e+00> : vector<8x8xf32>
    %29 = vector.multi_reduction <add>, %28, %cst_5 [2] : vector<8x8x8xf32> to vector<8x8xf32>
    %30 = vector.shape_cast %29 : vector<8x8xf32> to vector<8x8x1xf32>
    %31 = tpu.reciprocal %30 {approx = true} : vector<8x8x1xf32> -> vector<8x8x1xf32>
    %32 = vector.broadcast %31 : vector<8x8x1xf32> to vector<8x8x8xf32>
    %33 = arith.mulf %28, %32 : vector<8x8x8xf32>
    "tpu.trace_start"() <{level = 10 : i32, message = "hqk,hkd->hqd"}> : () -> ()
    %cst_6 = arith.constant dense<0.000000e+00> : vector<8x8x4xf32>
    %34 = tpu.matmul %33, %22, %cst_6 {dimension_numbers = #tpu.dot_dimension_numbers<[2], [1], [1], [2], [0, 0, 0, 1, 1, 2], [0], [0]>} : vector<8x8x8xf32>, vector<8x8x4xf32>, vector<8x8x4xf32> -> vector<8x8x4xf32>
    "tpu.trace_stop"() : () -> ()
    %35 = vector.extract_strided_slice %34 {offsets = [0, 0, 0], sizes = [1, 8, 4], strides = [1, 1, 1]} : vector<8x8x4xf32> to vector<1x8x4xf32>
    %36 = vector.shape_cast %35 : vector<1x8x4xf32> to vector<8x4xf32>
    %37 = vector.extract_strided_slice %34 {offsets = [1, 0, 0], sizes = [1, 8, 4], strides = [1, 1, 1]} : vector<8x8x4xf32> to vector<1x8x4xf32>
    %38 = vector.shape_cast %37 : vector<1x8x4xf32> to vector<8x4xf32>
    %39 = vector.extract_strided_slice %34 {offsets = [2, 0, 0], sizes = [1, 8, 4], strides = [1, 1, 1]} : vector<8x8x4xf32> to vector<1x8x4xf32>
    %40 = vector.shape_cast %39 : vector<1x8x4xf32> to vector<8x4xf32>
    %41 = vector.extract_strided_slice %34 {offsets = [3, 0, 0], sizes = [1, 8, 4], strides = [1, 1, 1]} : vector<8x8x4xf32> to vector<1x8x4xf32>
    %42 = vector.shape_cast %41 : vector<1x8x4xf32> to vector<8x4xf32>
    %43 = vector.extract_strided_slice %34 {offsets = [4, 0, 0], sizes = [1, 8, 4], strides = [1, 1, 1]} : vector<8x8x4xf32> to vector<1x8x4xf32>
    %44 = vector.shape_cast %43 : vector<1x8x4xf32> to vector<8x4xf32>
    %45 = vector.extract_strided_slice %34 {offsets = [5, 0, 0], sizes = [1, 8, 4], strides = [1, 1, 1]} : vector<8x8x4xf32> to vector<1x8x4xf32>
    %46 = vector.shape_cast %45 : vector<1x8x4xf32> to vector<8x4xf32>
    %47 = vector.extract_strided_slice %34 {offsets = [6, 0, 0], sizes = [1, 8, 4], strides = [1, 1, 1]} : vector<8x8x4xf32> to vector<1x8x4xf32>
    %48 = vector.shape_cast %47 : vector<1x8x4xf32> to vector<8x4xf32>
    %49 = vector.extract_strided_slice %34 {offsets = [7, 0, 0], sizes = [1, 8, 4], strides = [1, 1, 1]} : vector<8x8x4xf32> to vector<1x8x4xf32>
    %50 = vector.shape_cast %49 : vector<1x8x4xf32> to vector<8x4xf32>
    %51 = tpu.concatenate %36, %38, %40, %42, %44, %46, %48, %50 in 1 : vector<8x4xf32>, vector<8x4xf32>, vector<8x4xf32>, vector<8x4xf32>, vector<8x4xf32>, vector<8x4xf32>, vector<8x4xf32>, vector<8x4xf32> -> vector<8x32xf32>
    %c0_7 = arith.constant 0 : index
    %c0_8 = arith.constant 0 : index
    %52 = vector.load %arg2[%c0_7, %c0_8] : memref<8x32xf32, #tpu.memory_space<vmem>>, vector<8x32xf32>
    tpu.vector_store %arg2[%c0_7, %c0_8], %51 {strides = array<i32>} : memref<8x32xf32, #tpu.memory_space<vmem>>, vector<8x32xf32>,
    return
  }
}

</mosaic_0001>

<llo_original>
// kernel: multi_head_attention.1
$region0: #{multi_head_attention.1}
  #allocation0 [shape = 'u32[]', space=smem, size = 0x4, offset = 0x4, fixed_abs, tag = 'smem constant byte address 0x4 - core index']
  #allocation1 [shape = 'u32[72,128]{1,0:T(1,128)}', space=vmem, size = 0x9000, scoped, tag = 'internal scratch']
  %s0 = inlined_call_operand.hbm [shape: f32[8,32], index: 0, kind: input, shape index: {}]
  %s1 = inlined_call_operand.hbm [shape: f32[32,96], index: 1, kind: input, shape index: {}]
  %s2 = inlined_call_operand.hbm [shape: f32[8,32], index: 2, kind: output, shape index: {}]
  %s3 = sld [smem:[#allocation0]]
  $region26: #{multi_head_attention.1} parent=0
    _
  %s5 = ssub.s32 1, %s3
  %s6 = scalar_select 0, %s5, %s3
  $region1: #{multi_head_attention.1} parent=0
    #allocation2 [shape = 'u8[4096]{0}', space=vmem, size = 0x1000, scoped, tag = 'input window, operand 0, single buffered']
    #allocation3 [shape = 's32[1]{0}', space=sflag, size = 0x4, scoped, tag = 'scoped memory for multi_head_attention.1']
    #allocation4 [shape = 's32[1]{0}', space=sflag, size = 0x4, scoped, tag = 'scoped memory for multi_head_attention.1']
    #allocation5 [shape = 'u8[16384]{0}', space=vmem, size = 0x4000, scoped, tag = 'input window, operand 1, single buffered']
    #allocation6 [shape = 's32[1]{0}', space=sflag, size = 0x4, scoped, tag = 'scoped memory for multi_head_attention.1']
    #allocation7 [shape = 'u8[4096]{0}', space=vmem, size = 0x1000, scoped, tag = 'output window, operand 0, single buffered']
    %7 = vsyncpa [#allocation3], 0
    %8 = vsyncpa [#allocation6], 0
    %9 = vsyncpa [#allocation4], 0
    // Predicated region
    $region2: #{multi_head_attention.1} parent=1 // pred_check
      _
    $region3: #{multi_head_attention.1} parent=1 // pred_check_branch
      %11 = sbr.rel (0) target = $region5
    $region4: #{multi_head_attention.1} parent=1 // pred_region
      %13 = vsyncadd [#allocation3], 0
      %s15 = sshll.u32 %s0, 4
      %s16 = int_to_ptr.hbm [resolvable:$true] %s15
      %s17 = sshll.u32 [#allocation2], 4
      %s18 = int_to_ptr.vmem [resolvable:$true] %s17
      %20 = dma.hbm_to_vmem [thread:$0]  %s16, 128, %s18, [#allocation3]
    $region5: #{multi_head_attention.1} parent=1 // pred_fallthru
      _
    // Predicated region
    $region6: #{multi_head_attention.1} parent=1 // pred_check
      _
    $region7: #{multi_head_attention.1} parent=1 // pred_check_branch
      %22 = sbr.rel (0) target = $region9
    $region8: #{multi_head_attention.1} parent=1 // pred_region
      %24 = vsyncadd [#allocation6], 0
      %s25 = sshll.u32 %s1, 4
      %s26 = int_to_ptr.hbm [resolvable:$true] %s25
      %s27 = sshll.u32 [#allocation5], 4
      %s28 = int_to_ptr.vmem [resolvable:$true] %s27
      %33 = dma.hbm_to_vmem [thread:$0]  %s26, 512, %s28, [#allocation6], 128, 128, 8
    $region9: #{multi_head_attention.1} parent=1 // pred_fallthru
      _
    // Predicated region
    $region10: #{multi_head_attention.1} parent=1 // pred_check
      _
    $region11: #{multi_head_attention.1} parent=1 // pred_check_branch
      %35 = sbr.rel (0) target = $region13
    $region12: #{multi_head_attention.1} parent=1 // pred_region
      %37 = dma.done [#allocation3], 128
    $region13: #{multi_head_attention.1} parent=1 // pred_fallthru
      _
    // Predicated region
    $region14: #{multi_head_attention.1} parent=1 // pred_check
      _
    $region15: #{multi_head_attention.1} parent=1 // pred_check_branch
      %39 = sbr.rel (0) target = $region17
    $region16: #{multi_head_attention.1} parent=1 // pred_region
      %41 = dma.done [#allocation6], 512
    $region17: #{multi_head_attention.1} parent=1 // pred_fallthru
      _
    %v42 = vld [vmem:[#allocation2] sm:$0xff]
    %v43 = vld [vmem:[#allocation5] sm:$0xff]
    %v44 = vld [vmem:[#allocation5 + $0x8] sm:$0xff]
    %v45 = vld [vmem:[#allocation5 + $0x10] sm:$0xff]
    %v46 = vld [vmem:[#allocation5 + $0x18] sm:$0xff]
    %vm47 = vcmask 261120
    %v49 = vsel %vm47, %v42, 0
    %51 = vmatpush.msra.mxu0 0.0
    %52 = vmatpush.msra.mxu0 0.0
    %53 = vmatpush.msra.mxu0 0.0
    %54 = vmatpush.msra.mxu0 0.0
    %55 = vmatpush.msra.mxu0 0.0
    %56 = vmatpush.msra.mxu0 0.0
    %57 = vmatpush.msra.mxu0 0.0
    %58 = vmatpush.msra.mxu0 0.0
    %59 = vmatpush.msra.mxu0 0.0
    %60 = vmatpush.msra.mxu0 0.0
    %61 = vmatpush.msra.mxu0 0.0
    %62 = vmatpush.msra.mxu0 0.0
    %63 = vmatpush.msra.mxu0 %v46
    %64 = vmatpush.msra.mxu0 %v45
    %65 = vmatpush.msra.mxu0 %v44
    %66 = vmatpush.msra.mxu0 %v43
    %67 = vmatmul.f32.gmra.mxu0 %v49
    %v68 = vpop.f32.mrf.mxu0
    %v69 = vadd.f32 0.0, %v68
    %70 = vdwg.mxu0
    %72 = vrot.lane.b32.xlu0 %v69, 116
    %v73 = vpop.permute.xlu0 %72
    %74 = vrot.lane.b32.xlu0 %v69, 104
    %v75 = vpop.permute.xlu0 %74
    %76 = vrot.lane.b32.xlu0 %v69, 92
    %v77 = vpop.permute.xlu0 %76
    %78 = vrot.lane.b32.xlu0 %v69, 80
    %v79 = vpop.permute.xlu0 %78
    %80 = vrot.lane.b32.xlu0 %v69, 68
    %v81 = vpop.permute.xlu0 %80
    %82 = vrot.lane.b32.xlu0 %v69, 56
    %v83 = vpop.permute.xlu0 %82
    %84 = vrot.lane.b32.xlu0 %v69, 44
    %v85 = vpop.permute.xlu0 %84
    %86 = vrot.lane.b32.xlu0 %v69, 124
    %v87 = vpop.permute.xlu0 %86
    %vm88 = vcmask 31744
    %v89 = vsel %vm88, %v69, 0
    %v91 = vsel %vm88, %v87, 0
    %93 = vmatpush.xpose.msra.mxu0 0.0
    %94 = vmatpush.xpose.msra.mxu0 0.0
    %95 = vmatpush.xpose.msra.mxu0 0.0
    %96 = vmatpush.xpose.msra.mxu0 0.0
    %97 = vmatpush.xpose.msra.mxu0 0.0
    %98 = vmatpush.xpose.msra.mxu0 0.0
    %99 = vmatpush.xpose.msra.mxu0 0.0
    %100 = vmatpush.xpose.msra.mxu0 0.0
    %101 = vmatpush.xpose.msra.mxu0 0.0
    %102 = vmatpush.xpose.msra.mxu0 0.0
    %103 = vmatpush.xpose.msra.mxu0 0.0
    %104 = vmatpush.xpose.msra.mxu0 0.0
    %105 = vmatpush.xpose.msra.mxu0 0.0
    %106 = vmatpush.xpose.msra.mxu0 0.0
    %107 = vmatpush.xpose.msra.mxu0 0.0
    %108 = vmatpush.xpose.msra.mxu0 %v91
    %109 = vmatmul.f32.gmra.mxu0 %v89
    %v110 = vpop.f32.mrf.mxu0
    %v111 = vadd.f32 0.0, %v110
    %112 = vdwg.mxu0
    %113 = vrot.lane.b32.xlu0 %v73, 124
    %v114 = vpop.permute.xlu0 %113
    %v115 = vsel %vm88, %v73, 0
    %v117 = vsel %vm88, %v114, 0
    %119 = vmatpush.xpose.msra.mxu0 0.0
    %120 = vmatpush.xpose.msra.mxu0 0.0
    %121 = vmatpush.xpose.msra.mxu0 0.0
    %122 = vmatpush.xpose.msra.mxu0 0.0
    %123 = vmatpush.xpose.msra.mxu0 0.0
    %124 = vmatpush.xpose.msra.mxu0 0.0
    %125 = vmatpush.xpose.msra.mxu0 0.0
    %126 = vmatpush.xpose.msra.mxu0 0.0
    %127 = vmatpush.xpose.msra.mxu0 0.0
    %128 = vmatpush.xpose.msra.mxu0 0.0
    %129 = vmatpush.xpose.msra.mxu0 0.0
    %130 = vmatpush.xpose.msra.mxu0 0.0
    %131 = vmatpush.xpose.msra.mxu0 0.0
    %132 = vmatpush.xpose.msra.mxu0 0.0
    %133 = vmatpush.xpose.msra.mxu0 0.0
    %134 = vmatpush.xpose.msra.mxu0 %v117
    %135 = vmatmul.f32.gmra.mxu0 %v115
    %v136 = vpop.f32.mrf.mxu0
    %v137 = vadd.f32 0.0, %v136
    %138 = vdwg.mxu0
    %139 = vrot.lane.b32.xlu0 %v75, 124
    %v140 = vpop.permute.xlu0 %139
    %v141 = vsel %vm88, %v75, 0
    %v143 = vsel %vm88, %v140, 0
    %145 = vmatpush.xpose.msra.mxu0 0.0
    %146 = vmatpush.xpose.msra.mxu0 0.0
    %147 = vmatpush.xpose.msra.mxu0 0.0
    %148 = vmatpush.xpose.msra.mxu0 0.0
    %149 = vmatpush.xpose.msra.mxu0 0.0
    %150 = vmatpush.xpose.msra.mxu0 0.0
    %151 = vmatpush.xpose.msra.mxu0 0.0
    %152 = vmatpush.xpose.msra.mxu0 0.0
    %153 = vmatpush.xpose.msra.mxu0 0.0
    %154 = vmatpush.xpose.msra.mxu0 0.0
    %155 = vmatpush.xpose.msra.mxu0 0.0
    %156 = vmatpush.xpose.msra.mxu0 0.0
    %157 = vmatpush.xpose.msra.mxu0 0.0
    %158 = vmatpush.xpose.msra.mxu0 0.0
    %159 = vmatpush.xpose.msra.mxu0 0.0
    %160 = vmatpush.xpose.msra.mxu0 %v143
    %161 = vmatmul.f32.gmra.mxu0 %v141
    %v162 = vpop.f32.mrf.mxu0
    %v163 = vadd.f32 0.0, %v162
    %164 = vdwg.mxu0
    %165 = vrot.lane.b32.xlu0 %v77, 124
    %v166 = vpop.permute.xlu0 %165
    %v167 = vsel %vm88, %v77, 0
    %v169 = vsel %vm88, %v166, 0
    %171 = vmatpush.xpose.msra.mxu0 0.0
    %172 = vmatpush.xpose.msra.mxu0 0.0
    %173 = vmatpush.xpose.msra.mxu0 0.0
    %174 = vmatpush.xpose.msra.mxu0 0.0
    %175 = vmatpush.xpose.msra.mxu0 0.0
    %176 = vmatpush.xpose.msra.mxu0 0.0
    %177 = vmatpush.xpose.msra.mxu0 0.0
    %178 = vmatpush.xpose.msra.mxu0 0.0
    %179 = vmatpush.xpose.msra.mxu0 0.0
    %180 = vmatpush.xpose.msra.mxu0 0.0
    %181 = vmatpush.xpose.msra.mxu0 0.0
    %182 = vmatpush.xpose.msra.mxu0 0.0
    %183 = vmatpush.xpose.msra.mxu0 0.0
    %184 = vmatpush.xpose.msra.mxu0 0.0
    %185 = vmatpush.xpose.msra.mxu0 0.0
    %186 = vmatpush.xpose.msra.mxu0 %v169
    %187 = vmatmul.f32.gmra.mxu0 %v167
    %v188 = vpop.f32.mrf.mxu0
    %v189 = vadd.f32 0.0, %v188
    %190 = vdwg.mxu0
    %191 = vrot.lane.b32.xlu0 %v79, 124
    %v192 = vpop.permute.xlu0 %191
    %v193 = vsel %vm88, %v79, 0
    %v195 = vsel %vm88, %v192, 0
    %197 = vmatpush.xpose.msra.mxu0 0.0
    %198 = vmatpush.xpose.msra.mxu0 0.0
    %199 = vmatpush.xpose.msra.mxu0 0.0
    %200 = vmatpush.xpose.msra.mxu0 0.0
    %201 = vmatpush.xpose.msra.mxu0 0.0
    %202 = vmatpush.xpose.msra.mxu0 0.0
    %203 = vmatpush.xpose.msra.mxu0 0.0
    %204 = vmatpush.xpose.msra.mxu0 0.0
    %205 = vmatpush.xpose.msra.mxu0 0.0
    %206 = vmatpush.xpose.msra.mxu0 0.0
    %207 = vmatpush.xpose.msra.mxu0 0.0
    %208 = vmatpush.xpose.msra.mxu0 0.0
    %209 = vmatpush.xpose.msra.mxu0 0.0
    %210 = vmatpush.xpose.msra.mxu0 0.0
    %211 = vmatpush.xpose.msra.mxu0 0.0
    %212 = vmatpush.xpose.msra.mxu0 %v195
    %213 = vmatmul.f32.gmra.mxu0 %v193
    %v214 = vpop.f32.mrf.mxu0
    %v215 = vadd.f32 0.0, %v214
    %216 = vdwg.mxu0
    %217 = vrot.lane.b32.xlu0 %v81, 124
    %v218 = vpop.permute.xlu0 %217
    %v219 = vsel %vm88, %v81, 0
    %v221 = vsel %vm88, %v218, 0
    %223 = vmatpush.xpose.msra.mxu0 0.0
    %224 = vmatpush.xpose.msra.mxu0 0.0
    %225 = vmatpush.xpose.msra.mxu0 0.0
    %226 = vmatpush.xpose.msra.mxu0 0.0
    %227 = vmatpush.xpose.msra.mxu0 0.0
    %228 = vmatpush.xpose.msra.mxu0 0.0
    %229 = vmatpush.xpose.msra.mxu0 0.0
    %230 = vmatpush.xpose.msra.mxu0 0.0
    %231 = vmatpush.xpose.msra.mxu0 0.0
    %232 = vmatpush.xpose.msra.mxu0 0.0
    %233 = vmatpush.xpose.msra.mxu0 0.0
    %234 = vmatpush.xpose.msra.mxu0 0.0
    %235 = vmatpush.xpose.msra.mxu0 0.0
    %236 = vmatpush.xpose.msra.mxu0 0.0
    %237 = vmatpush.xpose.msra.mxu0 0.0
    %238 = vmatpush.xpose.msra.mxu0 %v221
    %239 = vmatmul.f32.gmra.mxu0 %v219
    %v240 = vpop.f32.mrf.mxu0
    %v241 = vadd.f32 0.0, %v240
    %242 = vdwg.mxu0
    %243 = vrot.lane.b32.xlu0 %v83, 124
    %v244 = vpop.permute.xlu0 %243
    %v245 = vsel %vm88, %v83, 0
    %v247 = vsel %vm88, %v244, 0
    %249 = vmatpush.xpose.msra.mxu0 0.0
    %250 = vmatpush.xpose.msra.mxu0 0.0
    %251 = vmatpush.xpose.msra.mxu0 0.0
    %252 = vmatpush.xpose.msra.mxu0 0.0
    %253 = vmatpush.xpose.msra.mxu0 0.0
    %254 = vmatpush.xpose.msra.mxu0 0.0
    %255 = vmatpush.xpose.msra.mxu0 0.0
    %256 = vmatpush.xpose.msra.mxu0 0.0
    %257 = vmatpush.xpose.msra.mxu0 0.0
    %258 = vmatpush.xpose.msra.mxu0 0.0
    %259 = vmatpush.xpose.msra.mxu0 0.0
    %260 = vmatpush.xpose.msra.mxu0 0.0
    %261 = vmatpush.xpose.msra.mxu0 0.0
    %262 = vmatpush.xpose.msra.mxu0 0.0
    %263 = vmatpush.xpose.msra.mxu0 0.0
    %264 = vmatpush.xpose.msra.mxu0 %v247
    %265 = vmatmul.f32.gmra.mxu0 %v245
    %v266 = vpop.f32.mrf.mxu0
    %v267 = vadd.f32 0.0, %v266
    %268 = vdwg.mxu0
    %269 = vrot.lane.b32.xlu0 %v85, 124
    %v270 = vpop.permute.xlu0 %269
    %v271 = vsel %vm88, %v85, 0
    %v273 = vsel %vm88, %v270, 0
    %275 = vmatpush.xpose.msra.mxu0 0.0
    %276 = vmatpush.xpose.msra.mxu0 0.0
    %277 = vmatpush.xpose.msra.mxu0 0.0
    %278 = vmatpush.xpose.msra.mxu0 0.0
    %279 = vmatpush.xpose.msra.mxu0 0.0
    %280 = vmatpush.xpose.msra.mxu0 0.0
    %281 = vmatpush.xpose.msra.mxu0 0.0
    %282 = vmatpush.xpose.msra.mxu0 0.0
    %283 = vmatpush.xpose.msra.mxu0 0.0
    %284 = vmatpush.xpose.msra.mxu0 0.0
    %285 = vmatpush.xpose.msra.mxu0 0.0
    %286 = vmatpush.xpose.msra.mxu0 0.0
    %287 = vmatpush.xpose.msra.mxu0 0.0
    %288 = vmatpush.xpose.msra.mxu0 0.0
    %289 = vmatpush.xpose.msra.mxu0 0.0
    %290 = vmatpush.xpose.msra.mxu0 %v273
    %291 = vmatmul.f32.gmra.mxu0 %v271
    %v292 = vpop.f32.mrf.mxu0
    %v293 = vadd.f32 0.0, %v292
    %294 = vdwg.mxu0
    %vm295 = vcmask 64512
    %v296 = vsel %vm295, %v111, -inf
    %297 = vmax.xlane.f32.xlu0 %v296
    %v298 = vpop.xlane.xlu0 %297
    %v299 = vsel %vm295, %v137, -inf
    %300 = vmax.xlane.f32.xlu0 %v299
    %v301 = vpop.xlane.xlu0 %300
    %v302 = vsel %vm295, %v163, -inf
    %303 = vmax.xlane.f32.xlu0 %v302
    %v304 = vpop.xlane.xlu0 %303
    %v305 = vsel %vm295, %v189, -inf
    %306 = vmax.xlane.f32.xlu0 %v305
    %v307 = vpop.xlane.xlu0 %306
    %v308 = vsel %vm295, %v215, -inf
    %309 = vmax.xlane.f32.xlu0 %v308
    %v310 = vpop.xlane.xlu0 %309
    %v311 = vsel %vm295, %v241, -inf
    %312 = vmax.xlane.f32.xlu0 %v311
    %v313 = vpop.xlane.xlu0 %312
    %v314 = vsel %vm295, %v267, -inf
    %315 = vmax.xlane.f32.xlu0 %v314
    %v316 = vpop.xlane.xlu0 %315
    %v317 = vsel %vm295, %v293, -inf
    %318 = vmax.xlane.f32.xlu0 %v317
    %v319 = vpop.xlane.xlu0 %318
    %v320 = vsub.f32 %v111, %v298
    %v321 = vsub.f32 %v137, %v301
    %v322 = vsub.f32 %v163, %v304
    %v323 = vsub.f32 %v189, %v307
    %v324 = vsub.f32 %v215, %v310
    %v325 = vsub.f32 %v241, %v313
    %v326 = vsub.f32 %v267, %v316
    %v327 = vsub.f32 %v293, %v319
    %v328 = vmul.f32 %v320, 1.442695
    %v329 = vpow.pop %v328
    %v330 = vmul.f32 %v321, 1.442695
    %v331 = vpow.pop %v330
    %v332 = vmul.f32 %v322, 1.442695
    %v333 = vpow.pop %v332
    %v334 = vmul.f32 %v323, 1.442695
    %v335 = vpow.pop %v334
    %v336 = vmul.f32 %v324, 1.442695
    %v337 = vpow.pop %v336
    %v338 = vmul.f32 %v325, 1.442695
    %v339 = vpow.pop %v338
    %v340 = vmul.f32 %v326, 1.442695
    %v341 = vpow.pop %v340
    %v342 = vmul.f32 %v327, 1.442695
    %v343 = vpow.pop %v342
    %v344 = vsel %vm295, %v329, 0.0
    %345 = vadd.xlane.f32.xlu0 %v344
    %v346 = vpop.xlane.xlu0 %345
    %v347 = vsel %vm295, %v331, 0.0
    %348 = vadd.xlane.f32.xlu0 %v347
    %v349 = vpop.xlane.xlu0 %348
    %v350 = vsel %vm295, %v333, 0.0
    %351 = vadd.xlane.f32.xlu0 %v350
    %v352 = vpop.xlane.xlu0 %351
    %v353 = vsel %vm295, %v335, 0.0
    %354 = vadd.xlane.f32.xlu0 %v353
    %v355 = vpop.xlane.xlu0 %354
    %v356 = vsel %vm295, %v337, 0.0
    %357 = vadd.xlane.f32.xlu0 %v356
    %v358 = vpop.xlane.xlu0 %357
    %v359 = vsel %vm295, %v339, 0.0
    %360 = vadd.xlane.f32.xlu0 %v359
    %v361 = vpop.xlane.xlu0 %360
    %v362 = vsel %vm295, %v341, 0.0
    %363 = vadd.xlane.f32.xlu0 %v362
    %v364 = vpop.xlane.xlu0 %363
    %v365 = vsel %vm295, %v343, 0.0
    %366 = vadd.xlane.f32.xlu0 %v365
    %v367 = vpop.xlane.xlu0 %366
    %v368 = vrcp.pop %v346
    %v369 = vrcp.pop %v349
    %v370 = vrcp.pop %v352
    %v371 = vrcp.pop %v355
    %v372 = vrcp.pop %v358
    %v373 = vrcp.pop %v361
    %v374 = vrcp.pop %v364
    %v375 = vrcp.pop %v367
    %v376 = vmul.f32 %v329, %v368
    %v377 = vmul.f32 %v331, %v369
    %v378 = vmul.f32 %v333, %v370
    %v379 = vmul.f32 %v335, %v371
    %v380 = vmul.f32 %v337, %v372
    %v381 = vmul.f32 %v339, %v373
    %v382 = vmul.f32 %v341, %v374
    %v383 = vmul.f32 %v343, %v375
    %384 = vrot.lane.b32.xlu0 %v69, 120
    %v385 = vpop.permute.xlu0 %384
    %v388 = vsel %vm295, %v376, 0
    %390 = vmatpush.msra.mxu0 0.0
    %391 = vmatpush.msra.mxu0 0.0
    %392 = vmatpush.msra.mxu0 0.0
    %393 = vmatpush.msra.mxu0 0.0
    %394 = vmatpush.msra.mxu0 0.0
    %395 = vmatpush.msra.mxu0 0.0
    %396 = vmatpush.msra.mxu0 0.0
    %397 = vmatpush.msra.mxu0 0.0
    %398 = vmatpush.msra.mxu0 0.0
    %399 = vmatpush.msra.mxu0 0.0
    %400 = vmatpush.msra.mxu0 0.0
    %401 = vmatpush.msra.mxu0 0.0
    %402 = vmatpush.msra.mxu0 0.0
    %403 = vmatpush.msra.mxu0 0.0
    %404 = vmatpush.msra.mxu0 0.0
    %405 = vmatpush.msra.mxu0 %v385
    %406 = vmatmul.f32.gmra.mxu0 %v388
    %v407 = vpop.f32.mrf.mxu0
    %v408 = vadd.f32 0.0, %v407
    %409 = vdwg.mxu0
    %410 = vrot.lane.b32.xlu0 %v73, 120
    %v411 = vpop.permute.xlu0 %410
    %v414 = vsel %vm295, %v377, 0
    %416 = vmatpush.msra.mxu0 0.0
    %417 = vmatpush.msra.mxu0 0.0
    %418 = vmatpush.msra.mxu0 0.0
    %419 = vmatpush.msra.mxu0 0.0
    %420 = vmatpush.msra.mxu0 0.0
    %421 = vmatpush.msra.mxu0 0.0
    %422 = vmatpush.msra.mxu0 0.0
    %423 = vmatpush.msra.mxu0 0.0
    %424 = vmatpush.msra.mxu0 0.0
    %425 = vmatpush.msra.mxu0 0.0
    %426 = vmatpush.msra.mxu0 0.0
    %427 = vmatpush.msra.mxu0 0.0
    %428 = vmatpush.msra.mxu0 0.0
    %429 = vmatpush.msra.mxu0 0.0
    %430 = vmatpush.msra.mxu0 0.0
    %431 = vmatpush.msra.mxu0 %v411
    %432 = vmatmul.f32.gmra.mxu0 %v414
    %v433 = vpop.f32.mrf.mxu0
    %v434 = vadd.f32 0.0, %v433
    %435 = vdwg.mxu0
    %436 = vrot.lane.b32.xlu0 %v75, 120
    %v437 = vpop.permute.xlu0 %436
    %v440 = vsel %vm295, %v378, 0
    %442 = vmatpush.msra.mxu0 0.0
    %443 = vmatpush.msra.mxu0 0.0
    %444 = vmatpush.msra.mxu0 0.0
    %445 = vmatpush.msra.mxu0 0.0
    %446 = vmatpush.msra.mxu0 0.0
    %447 = vmatpush.msra.mxu0 0.0
    %448 = vmatpush.msra.mxu0 0.0
    %449 = vmatpush.msra.mxu0 0.0
    %450 = vmatpush.msra.mxu0 0.0
    %451 = vmatpush.msra.mxu0 0.0
    %452 = vmatpush.msra.mxu0 0.0
    %453 = vmatpush.msra.mxu0 0.0
    %454 = vmatpush.msra.mxu0 0.0
    %455 = vmatpush.msra.mxu0 0.0
    %456 = vmatpush.msra.mxu0 0.0
    %457 = vmatpush.msra.mxu0 %v437
    %458 = vmatmul.f32.gmra.mxu0 %v440
    %v459 = vpop.f32.mrf.mxu0
    %v460 = vadd.f32 0.0, %v459
    %461 = vdwg.mxu0
    %462 = vrot.lane.b32.xlu0 %v77, 120
    %v463 = vpop.permute.xlu0 %462
    %v466 = vsel %vm295, %v379, 0
    %468 = vmatpush.msra.mxu0 0.0
    %469 = vmatpush.msra.mxu0 0.0
    %470 = vmatpush.msra.mxu0 0.0
    %471 = vmatpush.msra.mxu0 0.0
    %472 = vmatpush.msra.mxu0 0.0
    %473 = vmatpush.msra.mxu0 0.0
    %474 = vmatpush.msra.mxu0 0.0
    %475 = vmatpush.msra.mxu0 0.0
    %476 = vmatpush.msra.mxu0 0.0
    %477 = vmatpush.msra.mxu0 0.0
    %478 = vmatpush.msra.mxu0 0.0
    %479 = vmatpush.msra.mxu0 0.0
    %480 = vmatpush.msra.mxu0 0.0
    %481 = vmatpush.msra.mxu0 0.0
    %482 = vmatpush.msra.mxu0 0.0
    %483 = vmatpush.msra.mxu0 %v463
    %484 = vmatmul.f32.gmra.mxu0 %v466
    %v485 = vpop.f32.mrf.mxu0
    %v486 = vadd.f32 0.0, %v485
    %487 = vdwg.mxu0
    %488 = vrot.lane.b32.xlu0 %v79, 120
    %v489 = vpop.permute.xlu0 %488
    %v492 = vsel %vm295, %v380, 0
    %494 = vmatpush.msra.mxu0 0.0
    %495 = vmatpush.msra.mxu0 0.0
    %496 = vmatpush.msra.mxu0 0.0
    %497 = vmatpush.msra.mxu0 0.0
    %498 = vmatpush.msra.mxu0 0.0
    %499 = vmatpush.msra.mxu0 0.0
    %500 = vmatpush.msra.mxu0 0.0
    %501 = vmatpush.msra.mxu0 0.0
    %502 = vmatpush.msra.mxu0 0.0
    %503 = vmatpush.msra.mxu0 0.0
    %504 = vmatpush.msra.mxu0 0.0
    %505 = vmatpush.msra.mxu0 0.0
    %506 = vmatpush.msra.mxu0 0.0
    %507 = vmatpush.msra.mxu0 0.0
    %508 = vmatpush.msra.mxu0 0.0
    %509 = vmatpush.msra.mxu0 %v489
    %510 = vmatmul.f32.gmra.mxu0 %v492
    %v511 = vpop.f32.mrf.mxu0
    %v512 = vadd.f32 0.0, %v511
    %513 = vdwg.mxu0
    %514 = vrot.lane.b32.xlu0 %v81, 120
    %v515 = vpop.permute.xlu0 %514
    %v518 = vsel %vm295, %v381, 0
    %520 = vmatpush.msra.mxu0 0.0
    %521 = vmatpush.msra.mxu0 0.0
    %522 = vmatpush.msra.mxu0 0.0
    %523 = vmatpush.msra.mxu0 0.0
    %524 = vmatpush.msra.mxu0 0.0
    %525 = vmatpush.msra.mxu0 0.0
    %526 = vmatpush.msra.mxu0 0.0
    %527 = vmatpush.msra.mxu0 0.0
    %528 = vmatpush.msra.mxu0 0.0
    %529 = vmatpush.msra.mxu0 0.0
    %530 = vmatpush.msra.mxu0 0.0
    %531 = vmatpush.msra.mxu0 0.0
    %532 = vmatpush.msra.mxu0 0.0
    %533 = vmatpush.msra.mxu0 0.0
    %534 = vmatpush.msra.mxu0 0.0
    %535 = vmatpush.msra.mxu0 %v515
    %536 = vmatmul.f32.gmra.mxu0 %v518
    %v537 = vpop.f32.mrf.mxu0
    %v538 = vadd.f32 0.0, %v537
    %539 = vdwg.mxu0
    %540 = vrot.lane.b32.xlu0 %v83, 120
    %v541 = vpop.permute.xlu0 %540
    %v544 = vsel %vm295, %v382, 0
    %546 = vmatpush.msra.mxu0 0.0
    %547 = vmatpush.msra.mxu0 0.0
    %548 = vmatpush.msra.mxu0 0.0
    %549 = vmatpush.msra.mxu0 0.0
    %550 = vmatpush.msra.mxu0 0.0
    %551 = vmatpush.msra.mxu0 0.0
    %552 = vmatpush.msra.mxu0 0.0
    %553 = vmatpush.msra.mxu0 0.0
    %554 = vmatpush.msra.mxu0 0.0
    %555 = vmatpush.msra.mxu0 0.0
    %556 = vmatpush.msra.mxu0 0.0
    %557 = vmatpush.msra.mxu0 0.0
    %558 = vmatpush.msra.mxu0 0.0
    %559 = vmatpush.msra.mxu0 0.0
    %560 = vmatpush.msra.mxu0 0.0
    %561 = vmatpush.msra.mxu0 %v541
    %562 = vmatmul.f32.gmra.mxu0 %v544
    %v563 = vpop.f32.mrf.mxu0
    %v564 = vadd.f32 0.0, %v563
    %565 = vdwg.mxu0
    %566 = vrot.lane.b32.xlu0 %v85, 120
    %v567 = vpop.permute.xlu0 %566
    %v570 = vsel %vm295, %v383, 0
    %572 = vmatpush.msra.mxu0 0.0
    %573 = vmatpush.msra.mxu0 0.0
    %574 = vmatpush.msra.mxu0 0.0
    %575 = vmatpush.msra.mxu0 0.0
    %576 = vmatpush.msra.mxu0 0.0
    %577 = vmatpush.msra.mxu0 0.0
    %578 = vmatpush.msra.mxu0 0.0
    %579 = vmatpush.msra.mxu0 0.0
    %580 = vmatpush.msra.mxu0 0.0
    %581 = vmatpush.msra.mxu0 0.0
    %582 = vmatpush.msra.mxu0 0.0
    %583 = vmatpush.msra.mxu0 0.0
    %584 = vmatpush.msra.mxu0 0.0
    %585 = vmatpush.msra.mxu0 0.0
    %586 = vmatpush.msra.mxu0 0.0
    %587 = vmatpush.msra.mxu0 %v567
    %588 = vmatmul.f32.gmra.mxu0 %v570
    %v589 = vpop.f32.mrf.mxu0
    %v590 = vadd.f32 0.0, %v589
    %591 = vdwg.mxu0
    %593 = vrot.lane.b32.xlu0 %v434, 4
    %v594 = vpop.permute.xlu0 %593
    %597 = vrot.lane.b32.xlu0 %v460, 8
    %v598 = vpop.permute.xlu0 %597
    %601 = vrot.lane.b32.xlu0 %v486, 12
    %v602 = vpop.permute.xlu0 %601
    %605 = vrot.lane.b32.xlu0 %v512, 16
    %v606 = vpop.permute.xlu0 %605
    %609 = vrot.lane.b32.xlu0 %v538, 20
    %v610 = vpop.permute.xlu0 %609
    %613 = vrot.lane.b32.xlu0 %v564, 24
    %v614 = vpop.permute.xlu0 %613
    %617 = vrot.lane.b32.xlu0 %v590, 28
    %v618 = vpop.permute.xlu0 %617
    %v620 = vsel %vm88, %v408, %v594
    %v621 = vsel %vm295, %v620, %v598
    %vm622 = vcmask 97280
    %v623 = vsel %vm622, %v621, %v602
    %vm624 = vcmask 130048
    %v625 = vsel %vm624, %v623, %v606
    %vm626 = vcmask 162816
    %v627 = vsel %vm626, %v625, %v610
    %vm628 = vcmask 195584
    %v629 = vsel %vm628, %v627, %v614
    %vm630 = vcmask 228352
    %v631 = vsel %vm630, %v629, %v618
    %632 = vst.msk [vmem:[#allocation7] sm:$0xff] %vm47, %v631
    // Predicated region
    $region18: #{multi_head_attention.1} parent=1 // pred_check
      _
    $region19: #{multi_head_attention.1} parent=1 // pred_check_branch
      %634 = sbr.rel (0) target = $region21
    $region20: #{multi_head_attention.1} parent=1 // pred_region
      %636 = vsyncadd [#allocation4], 0
      %s638 = sshll.u32 [#allocation7], 4
      %s639 = int_to_ptr.vmem [resolvable:$true] %s638
      %s640 = sshll.u32 %s2, 4
      %s641 = int_to_ptr.hbm [resolvable:$true] %s640
      %643 = dma.vmem_to_hbm [thread:$0]  %s639, 128, %s641, [#allocation4]
    $region21: #{multi_head_attention.1} parent=1 // pred_fallthru
      _
    // Predicated region
    $region22: #{multi_head_attention.1} parent=1 // pred_check
      _
    $region23: #{multi_head_attention.1} parent=1 // pred_check_branch
      %645 = sbr.rel (0) target = $region25
    $region24: #{multi_head_attention.1} parent=1 // pred_region
      %647 = dma.done [#allocation4], 128
    $region25: #{multi_head_attention.1} parent=1 // pred_fallthru
      _
    %648 = vsyncpa [#allocation3], 1
    %649 = vsyncpa [#allocation6], 1
    %650 = vsyncpa [#allocation4], 1

</llo_original>
